<compile_context>
chip_gen: v5e
topology: v5e:2x2
jax: 0.10.0
libtpu: 0.0.40
codegen_flags: <defaults>
</compile_context>

<pallas_src>
import functools
import math

import jax
import jax.numpy as jnp
from jax.experimental import pallas as pl
from jax.experimental.pallas import tpu as pltpu


def _round_up(x, m):
    return (x + m - 1) // m * m


def _vmem_limit_bytes():
    """Scoped-VMEM budget derived from the actual part (128 MiB on v5e/v6e,
    64 MiB per TensorCore on v7x) instead of a hard-coded constant."""
    try:
        cap = pltpu.get_tpu_info().vmem_capacity_bytes
    except Exception:  # interpret mode / older jax / non-TPU backend
        cap = 64 * 1024 * 1024
    return int(min(cap // 2, 64 * 1024 * 1024))


def _choose_n_tile(B, N, M, S, rh, R, in_itemsize, vmem_limit):
    """Pick how many N-rows to process per grid step, budgeted against VMEM."""
    r_pad = _round_up(R, 128)
    s_pad = _round_up(S, 128)
    m_pad = _round_up(M, 8)
    # per N-row VMEM bytes (relation + state inputs, f32-or-input output), double-buffered
    per_row = 2 * (in_itemsize * (m_pad * r_pad + s_pad) + 4 * s_pad)
    # grid-resident blocks (split weights, bias, mask) — counted x2 to be safe
    resident = 2 * (4 * (_round_up(S, 8) + 2 * _round_up(rh, 8) + 8) * s_pad
                    + in_itemsize * m_pad * 128)
    budget = int(vmem_limit * 0.75) - resident
    rows = max(1, budget // per_row)

    if rows >= N or N <= 8:
        tn = N
    else:
        # block_shape constraint: second-to-last dim multiple of 8 (or == N)
        tn = max(8, (min(rows, N) // 8) * 8)

    # v7x: make sure the grid has >= 2 steps so "parallel" uses both TensorCores.
    if B == 1 and tn == N and N > 8:
        tn = _round_up(-(-N // 2), 8)
    return int(tn)


def _relation_agg_kernel(state_ref, rel_ref, mask_ref, w_s_ref, w_a_ref,
                         w_m_ref, b_ref, out_ref, *, rh):
    # state_ref : (1, TN, S)
    # rel_ref   : (1, TN, M, R)  — relation as-is; halves sliced here in VMEM
    # mask_ref  : (1, M, 1)      — alive mask for this batch (grid-resident)
    # w_s_ref   : (S, S)   w_a_ref / w_m_ref : (Rh, S)   b_ref : (1, S)
    # out_ref   : (1, TN, S)
    rel = rel_ref[0].astype(jnp.float32)            # (TN, M, R) upcast (v5e-safe)
    mask = mask_ref[...].astype(jnp.float32)        # (1, M, 1), broadcasts
    masked = rel * mask                              # VPU work, hides under DMA

    # masked mean / max over the entity axis M
    # TODO(synk): if bf16 inputs ever make this XLU-repack-bound on v7x, emit
    # relation M-major from the producer so the reduce is over the major axis.
    avr = jnp.mean(masked[:, :, :rh], axis=1)        # (TN, Rh)
    mx = jnp.max(masked[:, :, rh:], axis=1)          # (TN, Rh)

    # cat([state, avr, mx]) @ W == state@W_s + avr@W_a + mx@W_m  (no lane concat)
    y = jnp.dot(state_ref[0].astype(jnp.float32), w_s_ref[...].astype(jnp.float32),
                preferred_element_type=jnp.float32)
    y = y + jnp.dot(avr, w_a_ref[...].astype(jnp.float32),
                    preferred_element_type=jnp.float32)
    y = y + jnp.dot(mx, w_m_ref[...].astype(jnp.float32),
                    preferred_element_type=jnp.float32)
    y = y + b_ref[...].astype(jnp.float32)
    out_ref[0] = jnp.maximum(y, 0.0).astype(out_ref.dtype)


def relation_aggregator(state, relation, alive_mask, weight, bias):
    B, N, S = state.shape
    Bc, Nc, M, R = relation.shape
    assert (Bc, Nc) == (B, N)
    assert R % 2 == 0, "relation_len must be even (chunk(2, dim=-1))"
    Rh = R // 2
    assert weight.shape == (S + R, S)
    assert bias.shape == (1, S)
    assert alive_mask.shape == (B, M)

    in_itemsize = jnp.dtype(relation.dtype).itemsize
    vmem_limit = _vmem_limit_bytes()
    TN = _choose_n_tile(B, N, M, S, Rh, R, in_itemsize, vmem_limit)
    grid = (B, pl.cdiv(N, TN))

    # Cheap wrapper-side prep only (no copies of the dominant tensors):
    #   * mask viewed as (B, M, 1)         — B*M elements, negligible
    #   * Linear weight split into slices  — (S+R)*S elements, constant, tiny
    mask3 = alive_mask.reshape(B, M, 1)
    w_s = weight[:S]
    w_a = weight[S:S + Rh]
    w_m = weight[S + Rh:]

    out_dtype = state.dtype
    cost = pl.CostEstimate(
        flops=2 * B * N * (S + R) * S + 3 * B * N * M * R,
        transcendentals=0,
        bytes_accessed=(in_itemsize * (relation.size + state.size)
                        + 4 * (mask3.size + weight.size + bias.size)
                        + jnp.dtype(out_dtype).itemsize * B * N * S),
    )

    # TODO(synk): if production S < 128, pack 128//S row-groups per lane-dense
    # output tile to avoid masked partial stores (irrelevant while HBM-read-bound).
    kernel = functools.partial(_relation_agg_kernel, rh=Rh)
    out = pl.pallas_call(
        kernel,
        out_shape=jax.ShapeDtypeStruct((B, N, S), out_dtype),
        grid=grid,
        in_specs=[
            pl.BlockSpec((1, TN, S), lambda b, j: (b, j, 0)),        # state rows
            pl.BlockSpec((1, TN, M, R), lambda b, j: (b, j, 0, 0)),  # relation rows (unsplit)
            pl.BlockSpec((1, M, 1), lambda b, j: (b, 0, 0)),         # alive mask (per batch)
            pl.BlockSpec((S, S), lambda b, j: (0, 0)),               # W_state (resident)
            pl.BlockSpec((Rh, S), lambda b, j: (0, 0)),              # W_avr   (resident)
            pl.BlockSpec((Rh, S), lambda b, j: (0, 0)),              # W_max   (resident)
            pl.BlockSpec((1, S), lambda b, j: (0, 0)),               # bias    (resident)
        ],
        out_specs=pl.BlockSpec((1, TN, S), lambda b, j: (b, j, 0)),
        compiler_params=pltpu.CompilerParams(
            dimension_semantics=("parallel", "parallel"),
            vmem_limit_bytes=vmem_limit,
        ),
        cost_estimate=cost,
    )(state, relation, mask3, w_s, w_a, w_m, bias)
    return out


def _reference(state, relation, alive_mask, weight, bias):
    rh = relation.shape[-1] // 2
    rel_avr, rel_max = relation[..., :rh], relation[..., rh:]
    m = alive_mask[:, None, :, None]
    rel_avr = jnp.mean(rel_avr * m, axis=-2)
    rel_max = jnp.max(rel_max * m, axis=-2)
    feat = jnp.concatenate([state, rel_avr, rel_max], axis=-1)
    return jax.nn.relu(feat @ weight + bias)


def _run_case(key, B, N, M, S, R, in_dtype=jnp.float32, atol=1e-5, rtol=1e-5):
    k_state, k_rel, k_mask, k_w, k_b = jax.random.split(key, 5)
    state = jax.random.normal(k_state, (B, N, S), dtype=jnp.float32).astype(in_dtype)
    relation = jax.random.normal(k_rel, (B, N, M, R), dtype=jnp.float32).astype(in_dtype)
    alive_mask = (jax.random.uniform(k_mask, (B, M)) > 0.3).astype(jnp.float32)

    fan_in = S + R
    bound = 1.0 / math.sqrt(fan_in)
    weight = jax.random.uniform(k_w, (fan_in, S), minval=-bound, maxval=bound,
                                dtype=jnp.float32)
    bias = jax.random.uniform(k_b, (1, S), minval=-bound, maxval=bound,
                              dtype=jnp.float32)

    out = relation_aggregator(state, relation, alive_mask, weight, bias)
    out = jax.block_until_ready(out)

    ref = _reference(state.astype(jnp.float32), relation.astype(jnp.float32),
                     alive_mask, weight, bias)
    assert out.shape == (B, N, S)
    err = jnp.max(jnp.abs(out.astype(jnp.float32) - ref))
    assert jnp.allclose(out.astype(jnp.float32), ref, atol=atol, rtol=rtol), \
        f"mismatch vs reference (max abs err {err})"


if __name__ == "__main__":
    key = jax.random.PRNGKey(0)
    k1, k2, k3 = jax.random.split(key, 3)

    # Small deterministic shapes consistent with the module.
    _run_case(k1, B=2, N=8, M=8, S=32, R=32)
    # Ragged M (and N not a multiple of 8) exercises the non-aligned path.
    _run_case(k2, B=3, N=5, M=7, S=32, R=48)
    # bf16 activations: halves the dominant HBM stream in production; the kernel
    # upcasts to f32 before the mask multiply / reductions (v5e has no bf16 VPU)
    # and accumulates the dots in f32. Output follows the input dtype.
    _run_case(k3, B=2, N=8, M=8, S=32, R=32, in_dtype=jnp.bfloat16,
              atol=3e-2, rtol=3e-2)

    print("KERNEL_OK")
</pallas_src>

<mosaic_0001>
module attributes {stable_mosaic.version = 11 : i64} {
  func.func @_relation_agg_kernel(%arg0: i32, %arg1: i32, %arg2: memref<1x8x32xf32, #tpu.memory_space<vmem>>, %arg3: memref<1x8x8x32xf32, #tpu.memory_space<vmem>>, %arg4: memref<1x8x1xf32, #tpu.memory_space<vmem>>, %arg5: memref<32x32xf32, #tpu.memory_space<vmem>>, %arg6: memref<16x32xf32, #tpu.memory_space<vmem>>, %arg7: memref<16x32xf32, #tpu.memory_space<vmem>>, %arg8: memref<1x32xf32, #tpu.memory_space<vmem>>, %arg9: memref<1x8x32xf32, #tpu.memory_space<vmem>>) attributes {dimension_semantics = [#tpu.dimension_semantics<parallel>, #tpu.dimension_semantics<parallel>], iteration_bounds = array<i64: 2, 1>, scalar_prefetch = 0 : i64, scratch_operands = 0 : i64, tpu.core_type = #tpu.core_type<tc>, window_params = [{transform_indices = @transform_0, window_bounds = array<i64: 1, 8, 32>}, {transform_indices = @transform_1, window_bounds = array<i64: 1, 8, 8, 32>}, {transform_indices = @transform_2, window_bounds = array<i64: 1, 8, 1>}, {pipeline_mode = #tpu.pipeline_mode<synchronous>, transform_indices = @transform_3, window_bounds = array<i64: 32, 32>}, {pipeline_mode = #tpu.pipeline_mode<synchronous>, transform_indices = @transform_4, window_bounds = array<i64: 16, 32>}, {pipeline_mode = #tpu.pipeline_mode<synchronous>, transform_indices = @transform_5, window_bounds = array<i64: 16, 32>}, {pipeline_mode = #tpu.pipeline_mode<synchronous>, transform_indices = @transform_6, window_bounds = array<i64: 1, 32>}, {transform_indices = @transform_7, window_bounds = array<i64: 1, 8, 32>}]} {
    %c0 = arith.constant 0 : index
    %c0_0 = arith.constant 0 : index
    %c0_1 = arith.constant 0 : index
    %c0_2 = arith.constant 0 : index
    %0 = vector.load %arg3[%c0, %c0_0, %c0_1, %c0_2] : memref<1x8x8x32xf32, #tpu.memory_space<vmem>>, vector<1x8x8x32xf32>
    %1 = vector.shape_cast %0 : vector<1x8x8x32xf32> to vector<8x8x32xf32>
    %c0_3 = arith.constant 0 : index
    %c0_4 = arith.constant 0 : index
    %c0_5 = arith.constant 0 : index
    %2 = vector.load %arg4[%c0_3, %c0_4, %c0_5] : memref<1x8x1xf32, #tpu.memory_space<vmem>>, vector<1x8x1xf32>
    %3 = vector.broadcast %2 : vector<1x8x1xf32> to vector<8x8x32xf32>
    %4 = arith.mulf %1, %3 : vector<8x8x32xf32>
    %5 = vector.extract_strided_slice %4 {offsets = [0, 0, 0], sizes = [8, 8, 16], strides = [1, 1, 1]} : vector<8x8x32xf32> to vector<8x8x16xf32>
    %cst = arith.constant dense<0.000000e+00> : vector<8x16xf32>
    %6 = vector.multi_reduction <add>, %5, %cst [1] : vector<8x8x16xf32> to vector<8x16xf32>
    %cst_6 = arith.constant 8.000000e+00 : f32
    %7 = vector.broadcast %cst_6 : f32 to vector<8x16xf32>
    %8 = arith.divf %6, %7 : vector<8x16xf32>
    %9 = vector.extract_strided_slice %4 {offsets = [0, 0, 16], sizes = [8, 8, 16], strides = [1, 1, 1]} : vector<8x8x32xf32> to vector<8x8x16xf32>
    %cst_7 = arith.constant dense<0xFF800000> : vector<8x16xf32>
    %10 = vector.multi_reduction <maximumf>, %9, %cst_7 [1] : vector<8x8x16xf32> to vector<8x16xf32>
    %c0_8 = arith.constant 0 : index
    %c0_9 = arith.constant 0 : index
    %c0_10 = arith.constant 0 : index
    %11 = vector.load %arg2[%c0_8, %c0_9, %c0_10] : memref<1x8x32xf32, #tpu.memory_space<vmem>>, vector<1x8x32xf32>
    %12 = vector.shape_cast %11 : vector<1x8x32xf32> to vector<8x32xf32>
    %c0_11 = arith.constant 0 : index
    %c0_12 = arith.constant 0 : index
    %13 = vector.load %arg5[%c0_11, %c0_12] : memref<32x32xf32, #tpu.memory_space<vmem>>, vector<32x32xf32>
    %cst_13 = arith.constant dense<0.000000e+00> : vector<8x32xf32>
    %14 = tpu.matmul %12, %13, %cst_13 {dimension_numbers = #tpu.dot_dimension_numbers<[1], [0], [0], [1], [0, 0, 1, 1], [], []>} : vector<8x32xf32>, vector<32x32xf32>, vector<8x32xf32> -> vector<8x32xf32>
    %c0_14 = arith.constant 0 : index
    %c0_15 = arith.constant 0 : index
    %15 = vector.load %arg6[%c0_14, %c0_15] : memref<16x32xf32, #tpu.memory_space<vmem>>, vector<16x32xf32>
    %cst_16 = arith.constant dense<0.000000e+00> : vector<8x32xf32>
    %16 = tpu.matmul %8, %15, %cst_16 {dimension_numbers = #tpu.dot_dimension_numbers<[1], [0], [0], [1], [0, 0, 1, 1], [], []>} : vector<8x16xf32>, vector<16x32xf32>, vector<8x32xf32> -> vector<8x32xf32>
    %17 = arith.addf %14, %16 : vector<8x32xf32>
    %c0_17 = arith.constant 0 : index
    %c0_18 = arith.constant 0 : index
    %18 = vector.load %arg7[%c0_17, %c0_18] : memref<16x32xf32, #tpu.memory_space<vmem>>, vector<16x32xf32>
    %cst_19 = arith.constant dense<0.000000e+00> : vector<8x32xf32>
    %19 = tpu.matmul %10, %18, %cst_19 {dimension_numbers = #tpu.dot_dimension_numbers<[1], [0], [0], [1], [0, 0, 1, 1], [], []>} : vector<8x16xf32>, vector<16x32xf32>, vector<8x32xf32> -> vector<8x32xf32>
    %20 = arith.addf %17, %19 : vector<8x32xf32>
    %c0_20 = arith.constant 0 : index
    %c0_21 = arith.constant 0 : index
    %21 = vector.load %arg8[%c0_20, %c0_21] : memref<1x32xf32, #tpu.memory_space<vmem>>, vector<1x32xf32>
    %22 = vector.broadcast %21 : vector<1x32xf32> to vector<8x32xf32>
    %23 = arith.addf %20, %22 : vector<8x32xf32>
    %cst_22 = arith.constant 0.000000e+00 : f32
    %24 = vector.broadcast %cst_22 : f32 to vector<8x32xf32>
    %25 = arith.maximumf %23, %24 : vector<8x32xf32>
    %c0_23 = arith.constant 0 : index
    %c0_24 = arith.constant 0 : index
    %c0_25 = arith.constant 0 : index
    %26 = vector.load %arg9[%c0_23, %c0_24, %c0_25] : memref<1x8x32xf32, #tpu.memory_space<vmem>>, vector<1x8x32xf32>
    %27 = vector.shape_cast %26 : vector<1x8x32xf32> to vector<8x32xf32>
    %28 = vector.shape_cast %25 : vector<8x32xf32> to vector<1x8x32xf32>
    tpu.vector_store %arg9[%c0_23, %c0_24, %c0_25], %28 {strides = array<i32>} : memref<1x8x32xf32, #tpu.memory_space<vmem>>, vector<1x8x32xf32>,
    return
  }
  func.func @transform_0(%arg0: i32, %arg1: i32) -> (i32, i32, i32) {
    %c0_i32 = arith.constant 0 : i32
    %c0_i32_0 = arith.constant 0 : i32
    return %arg0, %arg1, %c0_i32 : i32, i32, i32
  }
  func.func @transform_1(%arg0: i32, %arg1: i32) -> (i32, i32, i32, i32) {
    %c0_i32 = arith.constant 0 : i32
    %c0_i32_0 = arith.constant 0 : i32
    %c0_i32_1 = arith.constant 0 : i32
    return %arg0, %arg1, %c0_i32, %c0_i32_0 : i32, i32, i32, i32
  }
  func.func @transform_2(%arg0: i32, %arg1: i32) -> (i32, i32, i32) {
    %c0_i32 = arith.constant 0 : i32
    %c0_i32_0 = arith.constant 0 : i32
    %c0_i32_1 = arith.constant 0 : i32
    return %arg0, %c0_i32, %c0_i32_0 : i32, i32, i32
  }
  func.func @transform_3(%arg0: i32, %arg1: i32) -> (i32, i32) {
    %c0_i32 = arith.constant 0 : i32
    %c0_i32_0 = arith.constant 0 : i32
    %c0_i32_1 = arith.constant 0 : i32
    return %c0_i32, %c0_i32_0 : i32, i32
  }
  func.func @transform_4(%arg0: i32, %arg1: i32) -> (i32, i32) {
    %c0_i32 = arith.constant 0 : i32
    %c0_i32_0 = arith.constant 0 : i32
    %c0_i32_1 = arith.constant 0 : i32
    return %c0_i32, %c0_i32_0 : i32, i32
  }
  func.func @transform_5(%arg0: i32, %arg1: i32) -> (i32, i32) {
    %c0_i32 = arith.constant 0 : i32
    %c0_i32_0 = arith.constant 0 : i32
    %c0_i32_1 = arith.constant 0 : i32
    return %c0_i32, %c0_i32_0 : i32, i32
  }
  func.func @transform_6(%arg0: i32, %arg1: i32) -> (i32, i32) {
    %c0_i32 = arith.constant 0 : i32
    %c0_i32_0 = arith.constant 0 : i32
    %c0_i32_1 = arith.constant 0 : i32
    return %c0_i32, %c0_i32_0 : i32, i32
  }
  func.func @transform_7(%arg0: i32, %arg1: i32) -> (i32, i32, i32) {
    %c0_i32 = arith.constant 0 : i32
    %c0_i32_0 = arith.constant 0 : i32
    return %arg0, %arg1, %c0_i32 : i32, i32, i32
  }
}

</mosaic_0001>

<llo_original>
// kernel: tpu_custom_call.1
$region0: #{tpu_custom_call.1}
  #allocation0 [shape = 'u32[]', space=smem, size = 0x4, offset = 0x4, fixed_abs, tag = 'smem constant byte address 0x4 - core index']
  #allocation1 [shape = 'u32[72,128]{1,0:T(1,128)}', space=vmem, size = 0x9000, scoped, tag = 'internal scratch']
  %s0 = inlined_call_operand.vmem [shape: f32[2,8,32], index: 0, kind: input, shape index: {}]
  %s1 = inlined_call_operand.hbm [shape: f32[2,8,8,32], index: 1, kind: input, shape index: {}]
  %s2 = inlined_call_operand.vmem [shape: f32[2,8,1], index: 2, kind: input, shape index: {}]
  %s3 = inlined_call_operand.hbm [shape: f32[32,32], index: 3, kind: input, shape index: {}]
  %s4 = inlined_call_operand.hbm [shape: f32[16,32], index: 4, kind: input, shape index: {}]
  %s5 = inlined_call_operand.hbm [shape: f32[16,32], index: 5, kind: input, shape index: {}]
  %s6 = inlined_call_operand.vmem [shape: f32[1,32], index: 6, kind: input, shape index: {}]
  %s7 = inlined_call_operand.hbm [shape: f32[2,8,32], index: 7, kind: output, shape index: {}]
  %s8 = sld [smem:[#allocation0]]
  $region77: #{tpu_custom_call.1} parent=0
    _
  %s10 = ssub.s32 1, %s8
  %s11 = scalar_select 0, %s10, %s8
  $region1: #{tpu_custom_call.1} parent=0
    #allocation2 [shape = 'u8[65536]{0}', space=vmem, size = 0x10000, scoped, tag = 'input window, operand 1']
    #allocation3 [shape = 's32[2]{0}', space=sflag, size = 0x8, scoped, tag = 'scoped memory for tpu_custom_call.1']
    #allocation4 [shape = 's32[2]{0}', space=sflag, size = 0x8, scoped, tag = 'scoped memory for tpu_custom_call.1']
    #allocation5 [shape = 'u8[16384]{0}', space=vmem, size = 0x4000, scoped, tag = 'input window, operand 3, single buffered']
    #allocation6 [shape = 's32[1]{0}', space=sflag, size = 0x4, scoped, tag = 'scoped memory for tpu_custom_call.1']
    #allocation7 [shape = 'u8[8192]{0}', space=vmem, size = 0x2000, scoped, tag = 'input window, operand 4, single buffered']
    #allocation8 [shape = 'u8[8192]{0}', space=vmem, size = 0x2000, scoped, tag = 'input window, operand 5, single buffered']
    #allocation9 [shape = 's32[1]{0}', space=sflag, size = 0x4, scoped, tag = 'scoped memory for tpu_custom_call.1']
    #allocation10 [shape = 'u8[8192]{0}', space=vmem, size = 0x2000, scoped, tag = 'output window, operand 0']
    %12 = vsyncpa [#allocation3], 0
    %s13 = scalar_lea.sflag [#allocation3], 1
    %14 = vsyncpa %s13, 0
    %15 = vsyncpa [#allocation6], 0
    %16 = vsyncpa [#allocation9], 0
    %17 = vsyncpa [#allocation4], 0
    %s18 = scalar_lea.sflag [#allocation4], 1
    %19 = vsyncpa %s18, 0
    loop: start=0, step=1, limit=4
    $region2: #{tpu_custom_call.1} parent=1 // loop_pre_header
      _
    $region3: #{tpu_custom_call.1} parent=1 // loop_header
      %s21 = sphi 0, %s25
      %p22 = scmp.ge.s32.totalorder %s21, 4
      %s28 = sphi 0, %s40
      %s29 = sphi 0, %s36
      %s30 = sphi 0, %s28
      %s31 = sphi 0, %s29
      %s32 = sphi 0, %s30
      %s33 = sphi 0, %s31
      %s45 = sphi 0, %s47
      %s48 = sphi 0, %s45
      %s49 = sphi 0, %s48
      %s65 = sphi 0, %s49
      %s73 = sphi 0, %s75
      %s76 = sphi 0, %s73
      %s77 = sphi 0, %s76
      %s93 = sphi 0, %s77
      %s99 = sphi 0, %s101
      %s102 = sphi 0, %s99
      %s103 = sphi 0, %s102
      %s119 = sphi 0, %s103
      %s123 = sphi 0, %s123
      %s125 = sphi 0, %s123
      %s126 = sphi 0, %s125
      %s140 = sphi 0, %s126
      %s144 = sphi 0, %s144
      %s146 = sphi 0, %s144
      %s147 = sphi 0, %s146
      %s161 = sphi 0, %s147
      %s165 = sphi 0, %s165
      %s167 = sphi 0, %s165
      %s168 = sphi 0, %s167
      %s182 = sphi 0, %s168
      %s186 = sphi 0, %s186
      %s188 = sphi 0, %s186
      %s189 = sphi 0, %s188
      %s203 = sphi 0, %s189
      %s211 = sphi 0, %s213
      %s214 = sphi 0, %s211
      %s215 = sphi 0, %s214
      %s231 = sphi 0, %s215
    $region4: #{tpu_custom_call.1} parent=1 // loop_header_branch
      %24 = sbr.rel (%p22) target = $region8
    $region5: #{tpu_custom_call.1} parent=1 // loop_body
      %s26 = ssub.s32 %s21, 1
      %s27 = ssub.s32 %s21, 2
      %s34 = sadd.s32 1, %s29
      %p35 = scmp.ge.s32.totalorder %s34, 1
      %s36 = scalar_select %p35, 0, %s34
      %s37 = sadd.s32 1, %s28
      %s38 = scalar_select %p35, %s37, %s28
      %p39 = scmp.ge.s32.totalorder %s38, 2
      %s40 = scalar_select %p39, 0, %s38
      %s41 = ssub.s32 %s28, %s40
      %s42 = ssub.s32 %s29, %s36
      %s43 = sor.u32 %s41, %s42
      %p44 = scmp.eq.s32.totalorder %s43, 0
      %s46 = sadd.s32 %s45, 1
      %s47 = scalar_select %p44, %s45, %s46
      %p50 = pneg %p44
      %p51 = scmp.eq.s32.totalorder %s21, 1
      %p52 = por %p50, %p51
      %p53 = scmp.ne.s32.totalorder %s45, %s48
      %p54 = scmp.eq.s32.totalorder %s21, 0
      %p55 = por %p53, %p54
      %p56 = scmp.ne.s32.totalorder %s45, %s48
      %p57 = scmp.eq.s32.totalorder %s26, 1
      %p58 = por %p56, %p57
      %p59 = scmp.ne.s32.totalorder %s48, %s49
      %p60 = scmp.eq.s32.totalorder %s26, 0
      %p61 = por %p59, %p60
      %p62 = scmp.ne.s32.totalorder %s48, %s49
      %p63 = scmp.eq.s32.totalorder %s27, 1
      %p64 = por %p62, %p63
      %p66 = scmp.ne.s32.totalorder %s49, %s65
      %p67 = scmp.eq.s32.totalorder %s27, 0
      %p68 = por %p66, %p67
      %s69 = ssub.s32 %s28, %s40
      %s70 = ssub.s32 %s29, %s36
      %s71 = sor.u32 %s69, %s70
      %p72 = scmp.eq.s32.totalorder %s71, 0
      %s74 = sadd.s32 %s73, 1
      %s75 = scalar_select %p72, %s73, %s74
      %p78 = pneg %p72
      %p79 = scmp.eq.s32.totalorder %s21, 1
      %p80 = por %p78, %p79
      %p81 = scmp.ne.s32.totalorder %s73, %s76
      %p82 = scmp.eq.s32.totalorder %s21, 0
      %p83 = por %p81, %p82
      %p84 = scmp.ne.s32.totalorder %s73, %s76
      %p85 = scmp.eq.s32.totalorder %s26, 1
      %p86 = por %p84, %p85
      %p87 = scmp.ne.s32.totalorder %s76, %s77
      %p88 = scmp.eq.s32.totalorder %s26, 0
      %p89 = por %p87, %p88
      %p90 = scmp.ne.s32.totalorder %s76, %s77
      %p91 = scmp.eq.s32.totalorder %s27, 1
      %p92 = por %p90, %p91
      %p94 = scmp.ne.s32.totalorder %s77, %s93
      %p95 = scmp.eq.s32.totalorder %s27, 0
      %p96 = por %p94, %p95
      %s97 = ssub.s32 %s28, %s40
      %p98 = scmp.eq.s32.totalorder %s97, 0
      %s100 = sadd.s32 %s99, 1
      %s101 = scalar_select %p98, %s99, %s100
      %p104 = pneg %p98
      %p105 = scmp.eq.s32.totalorder %s21, 1
      %p106 = por %p104, %p105
      %p107 = scmp.ne.s32.totalorder %s99, %s102
      %p108 = scmp.eq.s32.totalorder %s21, 0
      %p109 = por %p107, %p108
      %p110 = scmp.ne.s32.totalorder %s99, %s102
      %p111 = scmp.eq.s32.totalorder %s26, 1
      %p112 = por %p110, %p111
      %p113 = scmp.ne.s32.totalorder %s102, %s103
      %p114 = scmp.eq.s32.totalorder %s26, 0
      %p115 = por %p113, %p114
      %p116 = scmp.ne.s32.totalorder %s102, %s103
      %p117 = scmp.eq.s32.totalorder %s27, 1
      %p118 = por %p116, %p117
      %p120 = scmp.ne.s32.totalorder %s103, %s119
      %p121 = scmp.eq.s32.totalorder %s27, 0
      %p122 = por %p120, %p121
      %s124 = sadd.s32 %s123, 1
      %p127 = scmp.eq.s32.totalorder %s21, 1
      %p128 = scmp.ne.s32.totalorder %s123, %s125
      %p129 = scmp.eq.s32.totalorder %s21, 0
      %p130 = por %p128, %p129
      %p131 = scmp.ne.s32.totalorder %s123, %s125
      %p132 = scmp.eq.s32.totalorder %s26, 1
      %p133 = por %p131, %p132
      %p134 = scmp.ne.s32.totalorder %s125, %s126
      %p135 = scmp.eq.s32.totalorder %s26, 0
      %p136 = por %p134, %p135
      %p137 = scmp.ne.s32.totalorder %s125, %s126
      %p138 = scmp.eq.s32.totalorder %s27, 1
      %p139 = por %p137, %p138
      %p141 = scmp.ne.s32.totalorder %s126, %s140
      %p142 = scmp.eq.s32.totalorder %s27, 0
      %p143 = por %p141, %p142
      %s145 = sadd.s32 %s144, 1
      %p148 = scmp.eq.s32.totalorder %s21, 1
      %p149 = scmp.ne.s32.totalorder %s144, %s146
      %p150 = scmp.eq.s32.totalorder %s21, 0
      %p151 = por %p149, %p150
      %p152 = scmp.ne.s32.totalorder %s144, %s146
      %p153 = scmp.eq.s32.totalorder %s26, 1
      %p154 = por %p152, %p153
      %p155 = scmp.ne.s32.totalorder %s146, %s147
      %p156 = scmp.eq.s32.totalorder %s26, 0
      %p157 = por %p155, %p156
      %p158 = scmp.ne.s32.totalorder %s146, %s147
      %p159 = scmp.eq.s32.totalorder %s27, 1
      %p160 = por %p158, %p159
      %p162 = scmp.ne.s32.totalorder %s147, %s161
      %p163 = scmp.eq.s32.totalorder %s27, 0
      %p164 = por %p162, %p163
      %s166 = sadd.s32 %s165, 1
      %p169 = scmp.eq.s32.totalorder %s21, 1
      %p170 = scmp.ne.s32.totalorder %s165, %s167
      %p171 = scmp.eq.s32.totalorder %s21, 0
      %p172 = por %p170, %p171
      %p173 = scmp.ne.s32.totalorder %s165, %s167
      %p174 = scmp.eq.s32.totalorder %s26, 1
      %p175 = por %p173, %p174
      %p176 = scmp.ne.s32.totalorder %s167, %s168
      %p177 = scmp.eq.s32.totalorder %s26, 0
      %p178 = por %p176, %p177
      %p179 = scmp.ne.s32.totalorder %s167, %s168
      %p180 = scmp.eq.s32.totalorder %s27, 1
      %p181 = por %p179, %p180
      %p183 = scmp.ne.s32.totalorder %s168, %s182
      %p184 = scmp.eq.s32.totalorder %s27, 0
      %p185 = por %p183, %p184
      %s187 = sadd.s32 %s186, 1
      %p190 = scmp.eq.s32.totalorder %s21, 1
      %p191 = scmp.ne.s32.totalorder %s186, %s188
      %p192 = scmp.eq.s32.totalorder %s21, 0
      %p193 = por %p191, %p192
      %p194 = scmp.ne.s32.totalorder %s186, %s188
      %p195 = scmp.eq.s32.totalorder %s26, 1
      %p196 = por %p194, %p195
      %p197 = scmp.ne.s32.totalorder %s188, %s189
      %p198 = scmp.eq.s32.totalorder %s26, 0
      %p199 = por %p197, %p198
      %p200 = scmp.ne.s32.totalorder %s188, %s189
      %p201 = scmp.eq.s32.totalorder %s27, 1
      %p202 = por %p200, %p201
      %p204 = scmp.ne.s32.totalorder %s189, %s203
      %p205 = scmp.eq.s32.totalorder %s27, 0
      %p206 = por %p204, %p205
      %s207 = ssub.s32 %s28, %s40
      %s208 = ssub.s32 %s29, %s36
      %s209 = sor.u32 %s207, %s208
      %p210 = scmp.eq.s32.totalorder %s209, 0
      %s212 = sadd.s32 %s211, 1
      %s213 = scalar_select %p210, %s211, %s212
      %p216 = pneg %p210
      %p217 = scmp.eq.s32.totalorder %s21, 1
      %p218 = por %p216, %p217
      %p219 = scmp.ne.s32.totalorder %s211, %s214
      %p220 = scmp.eq.s32.totalorder %s21, 0
      %p221 = por %p219, %p220
      %p222 = scmp.ne.s32.totalorder %s211, %s214
      %p223 = scmp.eq.s32.totalorder %s26, 1
      %p224 = por %p222, %p223
      %p225 = scmp.ne.s32.totalorder %s214, %s215
      %p226 = scmp.eq.s32.totalorder %s26, 0
      %p227 = por %p225, %p226
      %p228 = scmp.ne.s32.totalorder %s214, %s215
      %p229 = scmp.eq.s32.totalorder %s27, 1
      %p230 = por %p228, %p229
      %p232 = scmp.ne.s32.totalorder %s215, %s231
      %p233 = scmp.eq.s32.totalorder %s27, 0
      %p234 = por %p232, %p233
      %p235 = scmp.le.s32.totalorder 1, %s21
      %p236 = scmp.lt.s32.totalorder %s21, 3
      %p237 = pnand %p235, %p236
      %p238 = pneg %p237
      // Predicated region
      $region9: #{tpu_custom_call.1} parent=5 // pred_check
        _
      $region10: #{tpu_custom_call.1} parent=5 // pred_check_branch
        %240 = sbr.rel (%p237) target = $region12
      $region11: #{tpu_custom_call.1} parent=5 // pred_region
        %s241 = ssub.s32 %s21, 1
        // Predicated region
        $region13: #{tpu_custom_call.1} parent=11 // pred_check
          %p242 = pneg %p136
        $region14: #{tpu_custom_call.1} parent=11 // pred_check_branch
          %244 = sbr.rel (%p242) target = $region16
        $region15: #{tpu_custom_call.1} parent=11 // pred_region
          %246 = vsyncadd [#allocation6], 0
          %s247 = sshll.u32 %s3, 4
          %s248 = int_to_ptr.hbm [resolvable:$true] %s247
          %s249 = sshll.u32 [#allocation5], 4
          %s250 = int_to_ptr.vmem [resolvable:$true] %s249
          %255 = dma.hbm_to_vmem [thread:$0]  %s248, 512, %s250, [#allocation6], 128, 128, 8
        $region16: #{tpu_custom_call.1} parent=11 // pred_fallthru
          _
        // Predicated region
        $region17: #{tpu_custom_call.1} parent=11 // pred_check
          %p256 = pneg %p157
        $region18: #{tpu_custom_call.1} parent=11 // pred_check_branch
          %258 = sbr.rel (%p256) target = $region20
        $region19: #{tpu_custom_call.1} parent=11 // pred_region
          %260 = vsyncadd [#allocation6], 0
          %s261 = sshll.u32 %s4, 4
          %s262 = int_to_ptr.hbm [resolvable:$true] %s261
          %s263 = sshll.u32 [#allocation7], 4
          %s264 = int_to_ptr.vmem [resolvable:$true] %s263
          %269 = dma.hbm_to_vmem [thread:$0]  %s262, 256, %s264, [#allocation6], 128, 128, 8
        $region20: #{tpu_custom_call.1} parent=11 // pred_fallthru
          _
        // Predicated region
        $region21: #{tpu_custom_call.1} parent=11 // pred_check
          %p270 = pneg %p178
        $region22: #{tpu_custom_call.1} parent=11 // pred_check_branch
          %272 = sbr.rel (%p270) target = $region24
        $region23: #{tpu_custom_call.1} parent=11 // pred_region
          %274 = vsyncadd [#allocation9], 0
          %s275 = sshll.u32 %s5, 4
          %s276 = int_to_ptr.hbm [resolvable:$true] %s275
          %s277 = sshll.u32 [#allocation8], 4
          %s278 = int_to_ptr.vmem [resolvable:$true] %s277
          %283 = dma.hbm_to_vmem [thread:$0]  %s276, 256, %s278, [#allocation9], 128, 128, 8
        $region24: #{tpu_custom_call.1} parent=11 // pred_fallthru
          _
        // Predicated region
        $region25: #{tpu_custom_call.1} parent=11 // pred_check
          %p284 = pneg %p199
        $region26: #{tpu_custom_call.1} parent=11 // pred_check_branch
          %286 = sbr.rel (%p284) target = $region28
        $region27: #{tpu_custom_call.1} parent=11 // pred_region
          _
        $region28: #{tpu_custom_call.1} parent=11 // pred_fallthru
          _
      $region12: #{tpu_custom_call.1} parent=5 // pred_fallthru
        _
      %p287 = scmp.lt.s32.totalorder %s21, 2
      // Predicated region
      $region29: #{tpu_custom_call.1} parent=5 // pred_check
        %p288 = pneg %p287
      $region30: #{tpu_custom_call.1} parent=5 // pred_check_branch
        %290 = sbr.rel (%p288) target = $region32
      $region31: #{tpu_custom_call.1} parent=5 // pred_region
        // Predicated region
        $region33: #{tpu_custom_call.1} parent=31 // pred_check
          %p291 = pneg %p55
        $region34: #{tpu_custom_call.1} parent=31 // pred_check_branch
          %293 = sbr.rel (%p291) target = $region36
        $region35: #{tpu_custom_call.1} parent=31 // pred_region
          %p294 = scmp.lt.s32.totalorder %s28, 1
          %s295 = scalar_select %p294, %s28, 1
          %p296 = scmp.lt.s32.totalorder %s29, 0
          %s297 = scalar_select %p296, %s29, 0
          %s298 = sadd.s32 %s297, %s295
          %s299 = smul.addr %s298, 8
          %s300 = scalar_lea.vmem %s0, %s299
        $region36: #{tpu_custom_call.1} parent=31 // pred_fallthru
          _
        // Predicated region
        $region37: #{tpu_custom_call.1} parent=31 // pred_check
          %p301 = pneg %p83
        $region38: #{tpu_custom_call.1} parent=31 // pred_check_branch
          %303 = sbr.rel (%p301) target = $region40
        $region39: #{tpu_custom_call.1} parent=31 // pred_region
          %s304 = sand.u32 %s73, 1
          %s305 = scalar_lea.sflag [#allocation3], %s304
          %s306 = sand.u32 %s73, 1
          %s307 = smul.addr %s306, 64
          %s308 = scalar_lea.vmem [#allocation2], %s307
          %s309 = smul.u32 8, %s29
          %311 = vsyncadd %s305, 0
          %s312 = smul.addr %s28, 8
          %s313 = sadd.s32 %s309, %s312
          %s314 = smul.addr %s313, 8
          %s315 = scalar_lea.hbm %s1, %s314
          %s316 = sshll.u32 %s315, 4
          %s317 = int_to_ptr.hbm [resolvable:$true] %s316
          %s318 = sshll.u32 %s308, 4
          %s319 = int_to_ptr.vmem [resolvable:$true] %s318
          %324 = dma.hbm_to_vmem [thread:$0]  %s317, 1024, %s319, %s305, 128, 128, 8
        $region40: #{tpu_custom_call.1} parent=31 // pred_fallthru
          _
        // Predicated region
        $region41: #{tpu_custom_call.1} parent=31 // pred_check
          %p325 = pneg %p109
        $region42: #{tpu_custom_call.1} parent=31 // pred_check_branch
          %327 = sbr.rel (%p325) target = $region44
        $region43: #{tpu_custom_call.1} parent=31 // pred_region
          %p328 = scmp.lt.s32.totalorder %s28, 1
          %s329 = scalar_select %p328, %s28, 1
          %s330 = smul.addr %s329, 8
          %s331 = scalar_lea.vmem %s2, %s330
        $region44: #{tpu_custom_call.1} parent=31 // pred_fallthru
          _
      $region32: #{tpu_custom_call.1} parent=5 // pred_fallthru
        _
      %p332 = scmp.le.s32.totalorder 1, %s21
      %p333 = scmp.lt.s32.totalorder %s21, 3
      %p334 = pnand %p332, %p333
      %p335 = pneg %p334
      // Predicated region
      $region45: #{tpu_custom_call.1} parent=5 // pred_check
        _
      $region46: #{tpu_custom_call.1} parent=5 // pred_check_branch
        %337 = sbr.rel (%p334) target = $region48
      $region47: #{tpu_custom_call.1} parent=5 // pred_region
        %s338 = ssub.s32 %s21, 1
        %s339 = sand.u32 %s76, 1
        %s340 = scalar_lea.sflag [#allocation3], %s339
        %s341 = sand.u32 %s76, 1
        %s342 = smul.addr %s341, 64
        %s343 = scalar_lea.vmem [#allocation2], %s342
        // Predicated region
        $region49: #{tpu_custom_call.1} parent=47 // pred_check
          %p344 = pneg %p89
        $region50: #{tpu_custom_call.1} parent=47 // pred_check_branch
          %346 = sbr.rel (%p344) target = $region52
        $region51: #{tpu_custom_call.1} parent=47 // pred_region
          %348 = dma.done %s340, 1024
        $region52: #{tpu_custom_call.1} parent=47 // pred_fallthru
          _
        // Predicated region
        $region53: #{tpu_custom_call.1} parent=47 // pred_check
          %p349 = pneg %p136
        $region54: #{tpu_custom_call.1} parent=47 // pred_check_branch
          %351 = sbr.rel (%p349) target = $region56
        $region55: #{tpu_custom_call.1} parent=47 // pred_region
          %353 = dma.done [#allocation6], 512
        $region56: #{tpu_custom_call.1} parent=47 // pred_fallthru
          _
        // Predicated region
        $region57: #{tpu_custom_call.1} parent=47 // pred_check
          %p354 = pneg %p157
        $region58: #{tpu_custom_call.1} parent=47 // pred_check_branch
          %356 = sbr.rel (%p354) target = $region60
        $region59: #{tpu_custom_call.1} parent=47 // pred_region
          %358 = dma.done [#allocation6], 256
        $region60: #{tpu_custom_call.1} parent=47 // pred_fallthru
          _
        // Predicated region
        $region61: #{tpu_custom_call.1} parent=47 // pred_check
          %p359 = pneg %p178
        $region62: #{tpu_custom_call.1} parent=47 // pred_check_branch
          %361 = sbr.rel (%p359) target = $region64
        $region63: #{tpu_custom_call.1} parent=47 // pred_region
          %363 = dma.done [#allocation9], 256
        $region64: #{tpu_custom_call.1} parent=47 // pred_fallthru
          _
        %p364 = scmp.lt.s32.totalorder %s30, 1
        %s365 = scalar_select %p364, %s30, 1
        %p366 = scmp.lt.s32.totalorder %s31, 0
        %s367 = scalar_select %p366, %s31, 0
        %s368 = sadd.s32 %s367, %s365
        %s369 = smul.addr %s368, 8
        %s370 = scalar_lea.vmem %s0, %s369
        %p371 = pneg %p61
        %p372 = pneg %p58
        %s373 = sand.u32 %s76, 1
        %s374 = scalar_lea.sflag [#allocation3], %s373
        %s375 = sand.u32 %s76, 1
        %s376 = smul.addr %s375, 64
        %s377 = scalar_lea.vmem [#allocation2], %s376
        %p378 = pneg %p89
        %p379 = pneg %p86
        %p380 = scmp.lt.s32.totalorder %s30, 1
        %s381 = scalar_select %p380, %s30, 1
        %s382 = smul.addr %s381, 8
        %s383 = scalar_lea.vmem %s2, %s382
        %p384 = pneg %p115
        %p385 = pneg %p112
        %p386 = pneg %p136
        %p387 = pneg %p133
        %p388 = pneg %p157
        %p389 = pneg %p154
        %p390 = pneg %p178
        %p391 = pneg %p175
        %p392 = pneg %p199
        %p393 = pneg %p196
        %p394 = pneg %p227
        %p395 = pneg %p224
        %s396 = sand.u32 %s214, 1
        %s397 = scalar_lea.sflag [#allocation4], %s396
        %s398 = sand.u32 %s214, 1
        %s399 = smul.addr %s398, 8
        %s400 = scalar_lea.vmem [#allocation10], %s399
        %p401 = scmp.lt.s32.totalorder %s30, 1
        %s402 = scalar_select %p401, %s30, 1
        %p403 = scmp.lt.s32.totalorder %s31, 0
        %s404 = scalar_select %p403, %s31, 0
        %s405 = sadd.s32 %s404, %s402
        %s406 = smul.addr %s405, 8
        %s407 = scalar_lea.vmem %s0, %s406
        %s408 = smul.u32 8, %s31
        %p409 = scmp.lt.s32.totalorder %s30, 1
        %s410 = scalar_select %p409, %s30, 1
        %s411 = smul.addr %s410, 8
        %s412 = scalar_lea.vmem %s2, %s411
        %v413 = vld [vmem:[%s343] sm:$0xff]
        %v414 = vld [vmem:[%s343 + $0x8] sm:$0xff]
        %v415 = vld [vmem:[%s343 + $0x10] sm:$0xff]
        %v416 = vld [vmem:[%s343 + $0x18] sm:$0xff]
        %v417 = vld [vmem:[%s343 + $0x20] sm:$0xff]
        %v418 = vld [vmem:[%s343 + $0x28] sm:$0xff]
        %v419 = vld [vmem:[%s343 + $0x30] sm:$0xff]
        %v420 = vld [vmem:[%s343 + $0x38] sm:$0xff]
        %v421 = vld [vmem:[%s412] sm:$0xff]
        %423 = vset.pattern.permute.xlu0 0
        %424 = vperm.xlu0 %423, %v421
        %v425 = vpop.permute.xlu0 %424
        %v427 = vmul.f32 %v413, %v425
        %v428 = vmul.f32 %v414, %v425
        %v429 = vmul.f32 %v415, %v425
        %v430 = vmul.f32 %v416, %v425
        %v431 = vmul.f32 %v417, %v425
        %v432 = vmul.f32 %v418, %v425
        %v433 = vmul.f32 %v419, %v425
        %v434 = vmul.f32 %v420, %v425
        %vm435 = vcmask 130048
        %v436 = vsel %vm435, %v427, 0.0
        %v437 = vrot.slane %v436, 4
        %v438 = vadd.f32 %v436, %v437
        %v439 = vrot.slane %v438, 2
        %v440 = vadd.f32 %v438, %v439
        %v441 = vrot.slane %v440, 1
        %v442 = vadd.f32 %v440, %v441
        %v443 = vsel %vm435, %v428, 0.0
        %v444 = vrot.slane %v443, 4
        %v445 = vadd.f32 %v443, %v444
        %v446 = vrot.slane %v445, 2
        %v447 = vadd.f32 %v445, %v446
        %v448 = vrot.slane %v447, 1
        %v449 = vadd.f32 %v447, %v448
        %v450 = vsel %vm435, %v429, 0.0
        %v451 = vrot.slane %v450, 4
        %v452 = vadd.f32 %v450, %v451
        %v453 = vrot.slane %v452, 2
        %v454 = vadd.f32 %v452, %v453
        %v455 = vrot.slane %v454, 1
        %v456 = vadd.f32 %v454, %v455
        %v457 = vsel %vm435, %v430, 0.0
        %v458 = vrot.slane %v457, 4
        %v459 = vadd.f32 %v457, %v458
        %v460 = vrot.slane %v459, 2
        %v461 = vadd.f32 %v459, %v460
        %v462 = vrot.slane %v461, 1
        %v463 = vadd.f32 %v461, %v462
        %v464 = vsel %vm435, %v431, 0.0
        %v465 = vrot.slane %v464, 4
        %v466 = vadd.f32 %v464, %v465
        %v467 = vrot.slane %v466, 2
        %v468 = vadd.f32 %v466, %v467
        %v469 = vrot.slane %v468, 1
        %v470 = vadd.f32 %v468, %v469
        %v471 = vsel %vm435, %v432, 0.0
        %v472 = vrot.slane %v471, 4
        %v473 = vadd.f32 %v471, %v472
        %v474 = vrot.slane %v473, 2
        %v475 = vadd.f32 %v473, %v474
        %v476 = vrot.slane %v475, 1
        %v477 = vadd.f32 %v475, %v476
        %v478 = vsel %vm435, %v433, 0.0
        %v479 = vrot.slane %v478, 4
        %v480 = vadd.f32 %v478, %v479
        %v481 = vrot.slane %v480, 2
        %v482 = vadd.f32 %v480, %v481
        %v483 = vrot.slane %v482, 1
        %v484 = vadd.f32 %v482, %v483
        %v485 = vsel %vm435, %v434, 0.0
        %v486 = vrot.slane %v485, 4
        %v487 = vadd.f32 %v485, %v486
        %v488 = vrot.slane %v487, 2
        %v489 = vadd.f32 %v487, %v488
        %v490 = vrot.slane %v489, 1
        %v491 = vadd.f32 %v489, %v490
        %v492 = vrcp.pop 8.0
        %v493 = vmul.f32 8.0, %v492
        %v494 = vsub.f32 1.0, %v493
        %v495 = vmul.f32 %v492, %v494
        %v496 = vadd.f32 %v492, %v495
        %vm497 = vweird.f32 %v492
        %v498 = vsel %vm497, %v492, %v496
        %v499 = vmul.f32 %v442, %v498
        %v500 = vmul.f32 %v449, %v498
        %v501 = vmul.f32 %v456, %v498
        %v502 = vmul.f32 %v463, %v498
        %v503 = vmul.f32 %v470, %v498
        %v504 = vmul.f32 %v477, %v498
        %v505 = vmul.f32 %v484, %v498
        %v506 = vmul.f32 %v491, %v498
        %vm507 = vcmask 261248
        %v508 = vsel %vm507, %v427, -inf
        %v509 = vrot.slane %v508, 4
        %v510 = vmax.f32 %v508, %v509
        %v511 = vrot.slane %v510, 2
        %v512 = vmax.f32 %v510, %v511
        %v513 = vrot.slane %v512, 1
        %v514 = vmax.f32 %v512, %v513
        %v515 = vsel %vm507, %v428, -inf
        %v516 = vrot.slane %v515, 4
        %v517 = vmax.f32 %v515, %v516
        %v518 = vrot.slane %v517, 2
        %v519 = vmax.f32 %v517, %v518
        %v520 = vrot.slane %v519, 1
        %v521 = vmax.f32 %v519, %v520
        %v522 = vsel %vm507, %v429, -inf
        %v523 = vrot.slane %v522, 4
        %v524 = vmax.f32 %v522, %v523
        %v525 = vrot.slane %v524, 2
        %v526 = vmax.f32 %v524, %v525
        %v527 = vrot.slane %v526, 1
        %v528 = vmax.f32 %v526, %v527
        %v529 = vsel %vm507, %v430, -inf
        %v530 = vrot.slane %v529, 4
        %v531 = vmax.f32 %v529, %v530
        %v532 = vrot.slane %v531, 2
        %v533 = vmax.f32 %v531, %v532
        %v534 = vrot.slane %v533, 1
        %v535 = vmax.f32 %v533, %v534
        %v536 = vsel %vm507, %v431, -inf
        %v537 = vrot.slane %v536, 4
        %v538 = vmax.f32 %v536, %v537
        %v539 = vrot.slane %v538, 2
        %v540 = vmax.f32 %v538, %v539
        %v541 = vrot.slane %v540, 1
        %v542 = vmax.f32 %v540, %v541
        %v543 = vsel %vm507, %v432, -inf
        %v544 = vrot.slane %v543, 4
        %v545 = vmax.f32 %v543, %v544
        %v546 = vrot.slane %v545, 2
        %v547 = vmax.f32 %v545, %v546
        %v548 = vrot.slane %v547, 1
        %v549 = vmax.f32 %v547, %v548
        %v550 = vsel %vm507, %v433, -inf
        %v551 = vrot.slane %v550, 4
        %v552 = vmax.f32 %v550, %v551
        %v553 = vrot.slane %v552, 2
        %v554 = vmax.f32 %v552, %v553
        %v555 = vrot.slane %v554, 1
        %v556 = vmax.f32 %v554, %v555
        %v557 = vsel %vm507, %v434, -inf
        %v558 = vrot.slane %v557, 4
        %v559 = vmax.f32 %v557, %v558
        %v560 = vrot.slane %v559, 2
        %v561 = vmax.f32 %v559, %v560
        %v562 = vrot.slane %v561, 1
        %v563 = vmax.f32 %v561, %v562
        %v564 = vld [vmem:[%s407] sm:$0xff]
        %v565 = vld [vmem:[#allocation5] sm:$0xff]
        %v566 = vld [vmem:[#allocation5 + $0x8] sm:$0xff]
        %v567 = vld [vmem:[#allocation5 + $0x10] sm:$0xff]
        %v568 = vld [vmem:[#allocation5 + $0x18] sm:$0xff]
        %v569 = vld [vmem:[#allocation7] sm:$0xff]
        %v570 = vld [vmem:[#allocation7 + $0x8] sm:$0xff]
        %vm579 = vcmask 1041409
        %v580 = vsel %vm579, %v500, %v499
        %vm581 = vcmask 1042434
        %v582 = vsel %vm581, %v501, %v580
        %vm583 = vcmask 1043459
        %v584 = vsel %vm583, %v502, %v582
        %vm585 = vcmask 1044484
        %v586 = vsel %vm585, %v503, %v584
        %vm587 = vcmask 1045509
        %v588 = vsel %vm587, %v504, %v586
        %vm589 = vcmask 1046534
        %v590 = vsel %vm589, %v505, %v588
        %vm591 = vcmask 1047559
        %v592 = vsel %vm591, %v506, %v590
        %v593 = vsel %vm435, %v592, 0
        %595 = vmatpush.msra.mxu0 0.0
        %596 = vmatpush.msra.mxu0 0.0
        %597 = vmatpush.msra.mxu0 0.0
        %598 = vmatpush.msra.mxu0 0.0
        %599 = vmatpush.msra.mxu0 0.0
        %600 = vmatpush.msra.mxu0 0.0
        %601 = vmatpush.msra.mxu0 0.0
        %602 = vmatpush.msra.mxu0 0.0
        %603 = vmatpush.msra.mxu0 0.0
        %604 = vmatpush.msra.mxu0 0.0
        %605 = vmatpush.msra.mxu0 0.0
        %606 = vmatpush.msra.mxu0 0.0
        %607 = vmatpush.msra.mxu0 0.0
        %608 = vmatpush.msra.mxu0 0.0
        %609 = vmatpush.msra.mxu0 %v570
        %610 = vmatpush.msra.mxu0 %v569
        %611 = vmatmul.f32.gmra.mxu0 %v593
        %v612 = vpop.f32.mrf.mxu0
        %v613 = vadd.f32 0.0, %v612
        %614 = vdwg.mxu0
        %vm615 = vcmask 261120
        %v617 = vsel %vm615, %v564, 0
        %619 = vmatpush.msra.mxu0 0.0
        %620 = vmatpush.msra.mxu0 0.0
        %621 = vmatpush.msra.mxu0 0.0
        %622 = vmatpush.msra.mxu0 0.0
        %623 = vmatpush.msra.mxu0 0.0
        %624 = vmatpush.msra.mxu0 0.0
        %625 = vmatpush.msra.mxu0 0.0
        %626 = vmatpush.msra.mxu0 0.0
        %627 = vmatpush.msra.mxu0 0.0
        %628 = vmatpush.msra.mxu0 0.0
        %629 = vmatpush.msra.mxu0 0.0
        %630 = vmatpush.msra.mxu0 0.0
        %631 = vmatpush.msra.mxu0 %v568
        %632 = vmatpush.msra.mxu0 %v567
        %633 = vmatpush.msra.mxu0 %v566
        %634 = vmatpush.msra.mxu0 %v565
        %635 = vmatmul.f32.gmra.mxu0 %v617
        %v636 = vpop.f32.mrf.mxu0
        %v637 = vadd.f32 %v613, %v636
        %638 = vdwg.mxu0
        %v639 = vld [vmem:[#allocation8] sm:$0xff]
        %v640 = vld [vmem:[#allocation8 + $0x8] sm:$0xff]
        %v649 = vsel %vm579, %v521, %v514
        %v650 = vsel %vm581, %v528, %v649
        %v651 = vsel %vm583, %v535, %v650
        %v652 = vsel %vm585, %v542, %v651
        %v653 = vsel %vm587, %v549, %v652
        %v654 = vsel %vm589, %v556, %v653
        %v655 = vsel %vm591, %v563, %v654
        %656 = vrot.lane.b32.xlu0 %v655, 112
        %v657 = vpop.permute.xlu0 %656
        %v658 = vsel %vm435, %v657, 0
        %660 = vmatpush.msra.mxu0 0.0
        %661 = vmatpush.msra.mxu0 0.0
        %662 = vmatpush.msra.mxu0 0.0
        %663 = vmatpush.msra.mxu0 0.0
        %664 = vmatpush.msra.mxu0 0.0
        %665 = vmatpush.msra.mxu0 0.0
        %666 = vmatpush.msra.mxu0 0.0
        %667 = vmatpush.msra.mxu0 0.0
        %668 = vmatpush.msra.mxu0 0.0
        %669 = vmatpush.msra.mxu0 0.0
        %670 = vmatpush.msra.mxu0 0.0
        %671 = vmatpush.msra.mxu0 0.0
        %672 = vmatpush.msra.mxu0 0.0
        %673 = vmatpush.msra.mxu0 0.0
        %674 = vmatpush.msra.mxu0 %v640
        %675 = vmatpush.msra.mxu0 %v639
        %676 = vmatmul.f32.gmra.mxu0 %v658
        %v677 = vpop.f32.mrf.mxu0
        %v678 = vadd.f32 0.0, %v677
        %679 = vdwg.mxu0
        %v680 = vadd.f32 %v637, %v678
        %v681 = vld [vmem:[%s6] sm:$0x1]
        %v683 = vperm.slane %v681, 0
        %v685 = vadd.f32 %v680, %v683
        %v686 = vmax.f32 %v685, 0.0
        %687 = vst.msk [vmem:[%s400] sm:$0xff] %vm615, %v686
        %s688 = sand.u32 %s214, 1
        %s689 = scalar_lea.sflag [#allocation4], %s688
        %s690 = sand.u32 %s214, 1
        %s691 = smul.addr %s690, 8
        %s692 = scalar_lea.vmem [#allocation10], %s691
        // Predicated region
        $region65: #{tpu_custom_call.1} parent=47 // pred_check
          %p693 = pneg %p224
        $region66: #{tpu_custom_call.1} parent=47 // pred_check_branch
          %695 = sbr.rel (%p693) target = $region68
        $region67: #{tpu_custom_call.1} parent=47 // pred_region
          %697 = vsyncadd %s689, 0
          %s698 = sadd.s32 %s31, %s30
          %s699 = smul.addr %s698, 8
          %s700 = scalar_lea.hbm %s7, %s699
          %s702 = sshll.u32 %s692, 4
          %s703 = int_to_ptr.vmem [resolvable:$true] %s702
          %s704 = sshll.u32 %s700, 4
          %s705 = int_to_ptr.hbm [resolvable:$true] %s704
          %707 = dma.vmem_to_hbm [thread:$0]  %s703, 128, %s705, %s689
        $region68: #{tpu_custom_call.1} parent=47 // pred_fallthru
          _
      $region48: #{tpu_custom_call.1} parent=5 // pred_fallthru
        _
      %p708 = scmp.le.s32.totalorder 2, %s21
      // Predicated region
      $region69: #{tpu_custom_call.1} parent=5 // pred_check
        %p709 = pneg %p708
      $region70: #{tpu_custom_call.1} parent=5 // pred_check_branch
        %711 = sbr.rel (%p709) target = $region72
      $region71: #{tpu_custom_call.1} parent=5 // pred_region
        %s712 = ssub.s32 %s21, 2
        // Predicated region
        $region73: #{tpu_custom_call.1} parent=71 // pred_check
          %p713 = pneg %p230
        $region74: #{tpu_custom_call.1} parent=71 // pred_check_branch
          %715 = sbr.rel (%p713) target = $region76
        $region75: #{tpu_custom_call.1} parent=71 // pred_region
          %s716 = sand.u32 %s215, 1
          %s717 = scalar_lea.sflag [#allocation4], %s716
          %s718 = sand.u32 %s215, 1
          %s719 = smul.addr %s718, 8
          %s720 = scalar_lea.vmem [#allocation10], %s719
          %722 = dma.done %s717, 128
        $region76: #{tpu_custom_call.1} parent=71 // pred_fallthru
          _
      $region72: #{tpu_custom_call.1} parent=5 // pred_fallthru
        _
    $region6: #{tpu_custom_call.1} parent=1 // loop_footer
      %s25 = sadd.s32 1, %s21
    $region7: #{tpu_custom_call.1} parent=1 // loop_footer_branch
      %20 = sbr.rel target = $region3
    $region8: #{tpu_custom_call.1} parent=1 // loop_exit
      _
    %723 = vsyncpa [#allocation3], 1
    %s724 = scalar_lea.sflag [#allocation3], 1
    %725 = vsyncpa %s724, 1
    %726 = vsyncpa [#allocation6], 1
    %727 = vsyncpa [#allocation9], 1
    %728 = vsyncpa [#allocation4], 1
    %s729 = scalar_lea.sflag [#allocation4], 1
    %730 = vsyncpa %s729, 1

</llo_original>
